<compile_context>
chip_gen: v7x
topology: tpu7x:2x2x1
jax: 0.10.0
libtpu: 0.0.40
codegen_flags: <defaults>
</compile_context>

<pallas_src>
import jax
import jax.numpy as jnp
from jax.experimental import pallas as pl
from jax.experimental.pallas import tpu as pltpu

BN_EPS = 1e-5
LEAKY_SLOPE = 0.2
_LANE = 128


def _bn_lrelu(h, g, be):
    """BatchNorm1d (batch stats, biased var) folded to scale/shift, then LeakyReLU(0.2)."""
    mean = jnp.mean(h, axis=0, keepdims=True)
    var = jnp.mean((h - mean) ** 2, axis=0, keepdims=True)   # biased, like PyTorch fwd
    scale = g * jax.lax.rsqrt(var + BN_EPS)                   # (1, D); rsqrt -> EUP slot
    shift = be - mean * scale                                 # (1, D)
    h = h * scale + shift                                     # single fused epilogue
    return jnp.maximum(h, LEAKY_SLOPE * h)                    # LeakyReLU(0.2), one VALU max


def generator_kernel(x_ref,
                     w1_ref, g1_ref, be1_ref,
                     w2_ref, g2_ref, be2_ref,
                     w3_ref, b3_ref,
                     o_ref):
    # bf16 MXU inputs, f32 accumulation. Layer-1/2 Linear biases are omitted:
    # they are exactly cancelled by the BatchNorm mean subtraction.
    h1 = jnp.dot(x_ref[...], w1_ref[...], preferred_element_type=jnp.float32)
    h1 = _bn_lrelu(h1, g1_ref[...], be1_ref[...])

    h2 = jnp.dot(h1.astype(jnp.bfloat16), w2_ref[...],
                 preferred_element_type=jnp.float32)
    h2 = _bn_lrelu(h2, g2_ref[...], be2_ref[...])

    logits = jnp.dot(h2.astype(jnp.bfloat16), w3_ref[...],
                     preferred_element_type=jnp.float32) + b3_ref[...]
    o_ref[...] = jax.nn.sigmoid(logits).astype(o_ref.dtype)


def generator_forward(x, params):
    """x: (B, latent_dim) f32 -> (B, feature_dim) f32.

    params = (w1, g1, be1, w2, g2, be2, w3, b3), Linear weights stored
    pre-transposed as (in_features, out_features).

    NOTE: the whole batch is kept in a single block so BatchNorm statistics
    are exact full-batch stats. For very large B, add a batch grid with a
    two-pass (sum / sum-of-squares) BN reduction instead of naive per-tile stats.
    """
    w1, g1, be1, w2, g2, be2, w3, b3 = params
    B = x.shape[0]
    feature_dim = w3.shape[1]

    # Lane-dense output: pad last layer to a multiple of 128 output columns so
    # the kernel issues full-width unmasked stores; slice back afterwards.
    n_pad = ((feature_dim + _LANE - 1) // _LANE) * _LANE
    if n_pad != feature_dim:
        w3 = jnp.pad(w3, ((0, 0), (0, n_pad - feature_dim)))
        b3 = jnp.pad(b3, ((0, 0), (0, n_pad - feature_dim)))

    # bf16 at the MXU inputs (halves HBM traffic for x and the weights).
    x_bf = x.astype(jnp.bfloat16)
    w1_bf = w1.astype(jnp.bfloat16)
    w2_bf = w2.astype(jnp.bfloat16)
    w3_bf = w3.astype(jnp.bfloat16)

    args = (x_bf, w1_bf, g1, be1, w2_bf, g2, be2, w3_bf, b3)

    # Request only (roughly) the real VMEM footprint: inputs + output + a few
    # (B, ~256) f32 intermediates, x2 margin, floored at 4 MiB. Keeps plenty of
    # headroom on v7x (64 MiB/TC).
    in_bytes = sum(a.size * a.dtype.itemsize for a in args)
    out_bytes = B * n_pad * 4
    act_bytes = 4 * B * 256 * 4
    vmem_limit = int(max(4 << 20, 2 * (in_bytes + out_bytes + act_bytes)))

    vmem = pl.BlockSpec(memory_space=pltpu.MemorySpace.VMEM)
    out = pl.pallas_call(
        generator_kernel,
        out_shape=jax.ShapeDtypeStruct((B, n_pad), jnp.float32),
        in_specs=[vmem] * len(args),
        out_specs=vmem,
        compiler_params=pltpu.CompilerParams(vmem_limit_bytes=vmem_limit),
    )(*args)
    return out[:, :feature_dim]


def init_params(key, latent_dim, feature_dim):
    """Deterministic synthetic init matching initialise_weights:
    Linear weights ~ N(0, 0.02); BN gamma = 1, beta = 0; final bias = 0.
    (Layer-1/2 Linear biases are omitted — cancelled by BatchNorm.)"""
    k1, k2, k3 = jax.random.split(key, 3)
    d1, d2 = 150, 100
    w1 = 0.02 * jax.random.normal(k1, (latent_dim, d1), jnp.float32)
    g1 = jnp.ones((1, d1), jnp.float32)
    be1 = jnp.zeros((1, d1), jnp.float32)

    w2 = 0.02 * jax.random.normal(k2, (d1, d2), jnp.float32)
    g2 = jnp.ones((1, d2), jnp.float32)
    be2 = jnp.zeros((1, d2), jnp.float32)

    w3 = 0.02 * jax.random.normal(k3, (d2, feature_dim), jnp.float32)
    b3 = jnp.zeros((1, feature_dim), jnp.float32)
    return (w1, g1, be1, w2, g2, be2, w3, b3)


def _reference(x, params):
    """Pure-JAX f32 reference of the same forward (for a tolerance check)."""
    w1, g1, be1, w2, g2, be2, w3, b3 = params

    def bn_lrelu(h, g, be):
        mean = jnp.mean(h, axis=0, keepdims=True)
        var = jnp.mean((h - mean) ** 2, axis=0, keepdims=True)
        h = (h - mean) * jax.lax.rsqrt(var + BN_EPS) * g + be
        return jnp.where(h > 0, h, LEAKY_SLOPE * h)

    h1 = bn_lrelu(x @ w1, g1, be1)
    h2 = bn_lrelu(h1 @ w2, g2, be2)
    return jax.nn.sigmoid(h2 @ w3 + b3)


if __name__ == "__main__":
    latent_dim = 32
    feature_dim = 64
    batch = 8  # BatchNorm1d in train mode needs batch > 1

    key = jax.random.PRNGKey(0)
    kx, kp = jax.random.split(key)
    x = jax.random.normal(kx, (batch, latent_dim), jnp.float32)
    params = init_params(kp, latent_dim, feature_dim)

    out = generator_forward(x, params)
    out = jax.block_until_ready(out)

    assert out.shape == (batch, feature_dim)
    assert bool(jnp.all(jnp.isfinite(out)))
    assert bool(jnp.all((out >= 0.0) & (out <= 1.0)))  # sigmoid range

    ref = _reference(x, params)
    assert bool(jnp.max(jnp.abs(out - ref)) < 2e-2)  # bf16-MXU vs f32 reference

    print("KERNEL_OK")
</pallas_src>

<mosaic_0001>
module attributes {stable_mosaic.version = 11 : i64} {
  func.func @generator_kernel(%arg0: memref<8x32xbf16, #tpu.memory_space<vmem>>, %arg1: memref<32x150xbf16, #tpu.memory_space<vmem>>, %arg2: memref<1x150xf32, #tpu.memory_space<vmem>>, %arg3: memref<1x150xf32, #tpu.memory_space<vmem>>, %arg4: memref<150x100xbf16, #tpu.memory_space<vmem>>, %arg5: memref<1x100xf32, #tpu.memory_space<vmem>>, %arg6: memref<1x100xf32, #tpu.memory_space<vmem>>, %arg7: memref<100x128xbf16, #tpu.memory_space<vmem>>, %arg8: memref<1x128xf32, #tpu.memory_space<vmem>>, %arg9: memref<8x128xf32, #tpu.memory_space<vmem>>) attributes {dimension_semantics = [], scalar_prefetch = 0 : i64, scratch_operands = 0 : i64, tpu.core_type = #tpu.core_type<tc>} {
    %c0 = arith.constant 0 : index
    %c0_0 = arith.constant 0 : index
    %0 = vector.load %arg0[%c0, %c0_0] : memref<8x32xbf16, #tpu.memory_space<vmem>>, vector<8x32xbf16>
    %c0_1 = arith.constant 0 : index
    %c0_2 = arith.constant 0 : index
    %1 = vector.load %arg1[%c0_1, %c0_2] : memref<32x150xbf16, #tpu.memory_space<vmem>>, vector<32x150xbf16>
    %cst = arith.constant dense<0.000000e+00> : vector<8x150xf32>
    %2 = tpu.matmul %0, %1, %cst {dimension_numbers = #tpu.dot_dimension_numbers<[1], [0], [0], [1], [0, 0, 1, 1], [], []>} : vector<8x32xbf16>, vector<32x150xbf16>, vector<8x150xf32> -> vector<8x150xf32>
    %c0_3 = arith.constant 0 : index
    %c0_4 = arith.constant 0 : index
    %3 = vector.load %arg2[%c0_3, %c0_4] : memref<1x150xf32, #tpu.memory_space<vmem>>, vector<1x150xf32>
    %c0_5 = arith.constant 0 : index
    %c0_6 = arith.constant 0 : index
    %4 = vector.load %arg3[%c0_5, %c0_6] : memref<1x150xf32, #tpu.memory_space<vmem>>, vector<1x150xf32>
    %cst_7 = arith.constant dense<0.000000e+00> : vector<150xf32>
    %5 = vector.multi_reduction <add>, %2, %cst_7 [0] : vector<8x150xf32> to vector<150xf32>
    %6 = vector.shape_cast %5 : vector<150xf32> to vector<1x150xf32>
    %cst_8 = arith.constant 8.000000e+00 : f32
    %7 = vector.broadcast %cst_8 : f32 to vector<1x150xf32>
    %8 = arith.divf %6, %7 : vector<1x150xf32>
    %9 = vector.broadcast %8 : vector<1x150xf32> to vector<8x150xf32>
    %10 = arith.subf %2, %9 : vector<8x150xf32>
    %11 = arith.mulf %10, %10 : vector<8x150xf32>
    %cst_9 = arith.constant dense<0.000000e+00> : vector<150xf32>
    %12 = vector.multi_reduction <add>, %11, %cst_9 [0] : vector<8x150xf32> to vector<150xf32>
    %13 = vector.shape_cast %12 : vector<150xf32> to vector<1x150xf32>
    %cst_10 = arith.constant 8.000000e+00 : f32
    %14 = vector.broadcast %cst_10 : f32 to vector<1x150xf32>
    %15 = arith.divf %13, %14 : vector<1x150xf32>
    %cst_11 = arith.constant 9.99999974E-6 : f32
    %16 = vector.broadcast %cst_11 : f32 to vector<1x150xf32>
    %17 = arith.addf %15, %16 : vector<1x150xf32>
    %18 = math.rsqrt %17 : vector<1x150xf32>
    %19 = arith.mulf %3, %18 : vector<1x150xf32>
    %20 = arith.mulf %8, %19 : vector<1x150xf32>
    %21 = arith.subf %4, %20 : vector<1x150xf32>
    %22 = vector.broadcast %19 : vector<1x150xf32> to vector<8x150xf32>
    %23 = arith.mulf %2, %22 : vector<8x150xf32>
    %24 = vector.broadcast %21 : vector<1x150xf32> to vector<8x150xf32>
    %25 = arith.addf %23, %24 : vector<8x150xf32>
    %cst_12 = arith.constant 2.000000e-01 : f32
    %26 = vector.broadcast %cst_12 : f32 to vector<8x150xf32>
    %27 = arith.mulf %26, %25 : vector<8x150xf32>
    %28 = arith.maximumf %25, %27 : vector<8x150xf32>
    %29 = arith.truncf %28 : vector<8x150xf32> to vector<8x150xbf16>
    %c0_13 = arith.constant 0 : index
    %c0_14 = arith.constant 0 : index
    %30 = vector.load %arg4[%c0_13, %c0_14] : memref<150x100xbf16, #tpu.memory_space<vmem>>, vector<150x100xbf16>
    %cst_15 = arith.constant dense<0.000000e+00> : vector<8x100xf32>
    %31 = tpu.matmul %29, %30, %cst_15 {dimension_numbers = #tpu.dot_dimension_numbers<[1], [0], [0], [1], [0, 0, 1, 1], [], []>} : vector<8x150xbf16>, vector<150x100xbf16>, vector<8x100xf32> -> vector<8x100xf32>
    %c0_16 = arith.constant 0 : index
    %c0_17 = arith.constant 0 : index
    %32 = vector.load %arg5[%c0_16, %c0_17] : memref<1x100xf32, #tpu.memory_space<vmem>>, vector<1x100xf32>
    %c0_18 = arith.constant 0 : index
    %c0_19 = arith.constant 0 : index
    %33 = vector.load %arg6[%c0_18, %c0_19] : memref<1x100xf32, #tpu.memory_space<vmem>>, vector<1x100xf32>
    %cst_20 = arith.constant dense<0.000000e+00> : vector<100xf32>
    %34 = vector.multi_reduction <add>, %31, %cst_20 [0] : vector<8x100xf32> to vector<100xf32>
    %35 = vector.shape_cast %34 : vector<100xf32> to vector<1x100xf32>
    %cst_21 = arith.constant 8.000000e+00 : f32
    %36 = vector.broadcast %cst_21 : f32 to vector<1x100xf32>
    %37 = arith.divf %35, %36 : vector<1x100xf32>
    %38 = vector.broadcast %37 : vector<1x100xf32> to vector<8x100xf32>
    %39 = arith.subf %31, %38 : vector<8x100xf32>
    %40 = arith.mulf %39, %39 : vector<8x100xf32>
    %cst_22 = arith.constant dense<0.000000e+00> : vector<100xf32>
    %41 = vector.multi_reduction <add>, %40, %cst_22 [0] : vector<8x100xf32> to vector<100xf32>
    %42 = vector.shape_cast %41 : vector<100xf32> to vector<1x100xf32>
    %cst_23 = arith.constant 8.000000e+00 : f32
    %43 = vector.broadcast %cst_23 : f32 to vector<1x100xf32>
    %44 = arith.divf %42, %43 : vector<1x100xf32>
    %cst_24 = arith.constant 9.99999974E-6 : f32
    %45 = vector.broadcast %cst_24 : f32 to vector<1x100xf32>
    %46 = arith.addf %44, %45 : vector<1x100xf32>
    %47 = math.rsqrt %46 : vector<1x100xf32>
    %48 = arith.mulf %32, %47 : vector<1x100xf32>
    %49 = arith.mulf %37, %48 : vector<1x100xf32>
    %50 = arith.subf %33, %49 : vector<1x100xf32>
    %51 = vector.broadcast %48 : vector<1x100xf32> to vector<8x100xf32>
    %52 = arith.mulf %31, %51 : vector<8x100xf32>
    %53 = vector.broadcast %50 : vector<1x100xf32> to vector<8x100xf32>
    %54 = arith.addf %52, %53 : vector<8x100xf32>
    %cst_25 = arith.constant 2.000000e-01 : f32
    %55 = vector.broadcast %cst_25 : f32 to vector<8x100xf32>
    %56 = arith.mulf %55, %54 : vector<8x100xf32>
    %57 = arith.maximumf %54, %56 : vector<8x100xf32>
    %58 = arith.truncf %57 : vector<8x100xf32> to vector<8x100xbf16>
    %c0_26 = arith.constant 0 : index
    %c0_27 = arith.constant 0 : index
    %59 = vector.load %arg7[%c0_26, %c0_27] : memref<100x128xbf16, #tpu.memory_space<vmem>>, vector<100x128xbf16>
    %cst_28 = arith.constant dense<0.000000e+00> : vector<8x128xf32>
    %60 = tpu.matmul %58, %59, %cst_28 {dimension_numbers = #tpu.dot_dimension_numbers<[1], [0], [0], [1], [0, 0, 1, 1], [], []>} : vector<8x100xbf16>, vector<100x128xbf16>, vector<8x128xf32> -> vector<8x128xf32>
    %c0_29 = arith.constant 0 : index
    %c0_30 = arith.constant 0 : index
    %61 = vector.load %arg8[%c0_29, %c0_30] : memref<1x128xf32, #tpu.memory_space<vmem>>, vector<1x128xf32>
    %62 = vector.broadcast %61 : vector<1x128xf32> to vector<8x128xf32>
    %63 = arith.addf %60, %62 : vector<8x128xf32>
    %64 = arith.negf %63 : vector<8x128xf32>
    %65 = math.exp %64 : vector<8x128xf32>
    %cst_31 = arith.constant 1.000000e+00 : f32
    %66 = vector.broadcast %cst_31 : f32 to vector<8x128xf32>
    %67 = arith.addf %66, %65 : vector<8x128xf32>
    %68 = arith.divf %66, %67 : vector<8x128xf32>
    %c0_32 = arith.constant 0 : index
    %c0_33 = arith.constant 0 : index
    %69 = vector.load %arg9[%c0_32, %c0_33] : memref<8x128xf32, #tpu.memory_space<vmem>>, vector<8x128xf32>
    tpu.vector_store %arg9[%c0_32, %c0_33], %68 {strides = array<i32>} : memref<8x128xf32, #tpu.memory_space<vmem>>, vector<8x128xf32>,
    return
  }
}

</mosaic_0001>

<llo_original>
// kernel: tpu_custom_call.1
$region0: #{tpu_custom_call.1}
  #allocation0 [shape = 'u32[]', space=smem, size = 0x4, offset = 0x4, fixed_abs, tag = 'smem constant byte address 0x4 - core index']
  #allocation1 [shape = 'u32[144,128]{1,0:T(1,128)}', space=vmem, size = 0x12000, scoped, tag = 'internal scratch']
  %s0 = inlined_call_operand.hbm [shape: bf16[8,32], index: 0, kind: input, shape index: {}]
  %s1 = inlined_call_operand.hbm [shape: bf16[32,150], index: 1, kind: input, shape index: {}]
  %s2 = inlined_call_operand.vmem [shape: f32[1,150], index: 2, kind: input, shape index: {}]
  %s3 = inlined_call_operand.vmem [shape: f32[1,150], index: 3, kind: input, shape index: {}]
  %s4 = inlined_call_operand.hbm [shape: bf16[150,100], index: 4, kind: input, shape index: {}]
  %s5 = inlined_call_operand.vmem [shape: f32[1,100], index: 5, kind: input, shape index: {}]
  %s6 = inlined_call_operand.vmem [shape: f32[1,100], index: 6, kind: input, shape index: {}]
  %s7 = inlined_call_operand.hbm [shape: bf16[100,128], index: 7, kind: input, shape index: {}]
  %s8 = inlined_call_operand.vmem [shape: f32[1,128], index: 8, kind: input, shape index: {}]
  %s9 = inlined_call_operand.hbm [shape: f32[8,128], index: 9, kind: output, shape index: {}]
  %s10 = sld [smem:[#allocation0]]
  $region62: #{tpu_custom_call.1} parent=0
    _
  %s12 = ssub.s32 1, %s10
  %s13 = scalar_select 0, %s12, %s10
  $region1: #{tpu_custom_call.1} parent=0
    #allocation2 [shape = 'u8[2048]{0}', space=vmem, size = 0x800, scoped, tag = 'input window, operand 0, single buffered']
    #allocation3 [shape = 's32[1]{0}', space=sflag, size = 0x4, scoped, tag = 'scoped memory for tpu_custom_call.1']
    #allocation4 [shape = 's32[1]{0}', space=sflag, size = 0x4, scoped, tag = 'scoped memory for tpu_custom_call.1']
    #allocation5 [shape = 'u8[16384]{0}', space=vmem, size = 0x4000, scoped, tag = 'input window, operand 1, single buffered']
    #allocation6 [shape = 's32[1]{0}', space=sflag, size = 0x4, scoped, tag = 'scoped memory for tpu_custom_call.1']
    #allocation7 [shape = 'u8[38912]{0}', space=vmem, size = 0x9800, scoped, tag = 'input window, operand 4, single buffered']
    #allocation8 [shape = 'u8[26624]{0}', space=vmem, size = 0x6800, scoped, tag = 'input window, operand 7, single buffered']
    #allocation9 [shape = 's32[1]{0}', space=sflag, size = 0x4, scoped, tag = 'scoped memory for tpu_custom_call.1']
    #allocation10 [shape = 'u8[4096]{0}', space=vmem, size = 0x1000, scoped, tag = 'output window, operand 0, single buffered']
    %14 = vsyncpa [#allocation3], 0
    %15 = vsyncpa [#allocation6], 0
    %16 = vsyncpa [#allocation9], 0
    %17 = vsyncpa [#allocation4], 0
    // Predicated region
    $region2: #{tpu_custom_call.1} parent=1 // pred_check
      _
    $region3: #{tpu_custom_call.1} parent=1 // pred_check_branch
      %19 = sbr.rel (0) target = $region5
    $region4: #{tpu_custom_call.1} parent=1 // pred_region
      %s21 = ssub.s32 64, 64
      %22 = vsyncadd [#allocation3], %s21
      %s24 = sshll.u32 [#allocation2], 4
      %s25 = int_to_ptr.vmem [resolvable:$true] %s24
      %27 = dma.hbm_to_vmem [thread:$0]  %s0, 64, %s25, [#allocation3]
    $region5: #{tpu_custom_call.1} parent=1 // pred_fallthru
      _
    // Predicated region
    $region6: #{tpu_custom_call.1} parent=1 // pred_check
      _
    $region7: #{tpu_custom_call.1} parent=1 // pred_check_branch
      %29 = sbr.rel (0) target = $region9
    $region8: #{tpu_custom_call.1} parent=1 // pred_region
      %s31 = ssub.s32 512, 512
      %32 = vsyncadd [#allocation6], %s31
      %s33 = sshll.u32 [#allocation5], 4
      %s34 = int_to_ptr.vmem [resolvable:$true] %s33
      %39 = dma.hbm_to_vmem [thread:$0]  %s1, 512, %s34, [#allocation6], 128, 128, 8
    $region9: #{tpu_custom_call.1} parent=1 // pred_fallthru
      _
    // Predicated region
    $region10: #{tpu_custom_call.1} parent=1 // pred_check
      _
    $region11: #{tpu_custom_call.1} parent=1 // pred_check_branch
      %41 = sbr.rel (0) target = $region13
    $region12: #{tpu_custom_call.1} parent=1 // pred_region
      _
    $region13: #{tpu_custom_call.1} parent=1 // pred_fallthru
      _
    // Predicated region
    $region14: #{tpu_custom_call.1} parent=1 // pred_check
      _
    $region15: #{tpu_custom_call.1} parent=1 // pred_check_branch
      %43 = sbr.rel (0) target = $region17
    $region16: #{tpu_custom_call.1} parent=1 // pred_region
      _
    $region17: #{tpu_custom_call.1} parent=1 // pred_fallthru
      _
    // Predicated region
    $region18: #{tpu_custom_call.1} parent=1 // pred_check
      _
    $region19: #{tpu_custom_call.1} parent=1 // pred_check_branch
      %45 = sbr.rel (0) target = $region21
    $region20: #{tpu_custom_call.1} parent=1 // pred_region
      %s47 = ssub.s32 1216, 1216
      %48 = vsyncadd [#allocation6], %s47
      %s49 = sshll.u32 [#allocation7], 4
      %s50 = int_to_ptr.vmem [resolvable:$true] %s49
      %55 = dma.hbm_to_vmem [thread:$0]  %s4, 1216, %s50, [#allocation6], 64, 64, 4
    $region21: #{tpu_custom_call.1} parent=1 // pred_fallthru
      _
    // Predicated region
    $region22: #{tpu_custom_call.1} parent=1 // pred_check
      _
    $region23: #{tpu_custom_call.1} parent=1 // pred_check_branch
      %57 = sbr.rel (0) target = $region25
    $region24: #{tpu_custom_call.1} parent=1 // pred_region
      _
    $region25: #{tpu_custom_call.1} parent=1 // pred_fallthru
      _
    // Predicated region
    $region26: #{tpu_custom_call.1} parent=1 // pred_check
      _
    $region27: #{tpu_custom_call.1} parent=1 // pred_check_branch
      %59 = sbr.rel (0) target = $region29
    $region28: #{tpu_custom_call.1} parent=1 // pred_region
      _
    $region29: #{tpu_custom_call.1} parent=1 // pred_fallthru
      _
    // Predicated region
    $region30: #{tpu_custom_call.1} parent=1 // pred_check
      _
    $region31: #{tpu_custom_call.1} parent=1 // pred_check_branch
      %61 = sbr.rel (0) target = $region33
    $region32: #{tpu_custom_call.1} parent=1 // pred_region
      %s63 = ssub.s32 832, 832
      %64 = vsyncadd [#allocation9], %s63
      %s65 = sshll.u32 [#allocation8], 4
      %s66 = int_to_ptr.vmem [resolvable:$true] %s65
      %71 = dma.hbm_to_vmem [thread:$0]  %s7, 832, %s66, [#allocation9], 64, 64, 4
    $region33: #{tpu_custom_call.1} parent=1 // pred_fallthru
      _
    // Predicated region
    $region34: #{tpu_custom_call.1} parent=1 // pred_check
      _
    $region35: #{tpu_custom_call.1} parent=1 // pred_check_branch
      %73 = sbr.rel (0) target = $region37
    $region36: #{tpu_custom_call.1} parent=1 // pred_region
      _
    $region37: #{tpu_custom_call.1} parent=1 // pred_fallthru
      _
    // Predicated region
    $region38: #{tpu_custom_call.1} parent=1 // pred_check
      _
    $region39: #{tpu_custom_call.1} parent=1 // pred_check_branch
      %75 = sbr.rel (0) target = $region41
    $region40: #{tpu_custom_call.1} parent=1 // pred_region
      %76 = dma.done [#allocation3], 64
    $region41: #{tpu_custom_call.1} parent=1 // pred_fallthru
      _
    // Predicated region
    $region42: #{tpu_custom_call.1} parent=1 // pred_check
      _
    $region43: #{tpu_custom_call.1} parent=1 // pred_check_branch
      %78 = sbr.rel (0) target = $region45
    $region44: #{tpu_custom_call.1} parent=1 // pred_region
      %79 = dma.done [#allocation6], 512
    $region45: #{tpu_custom_call.1} parent=1 // pred_fallthru
      _
    // Predicated region
    $region46: #{tpu_custom_call.1} parent=1 // pred_check
      _
    $region47: #{tpu_custom_call.1} parent=1 // pred_check_branch
      %81 = sbr.rel (0) target = $region49
    $region48: #{tpu_custom_call.1} parent=1 // pred_region
      %82 = dma.done [#allocation6], 1216
    $region49: #{tpu_custom_call.1} parent=1 // pred_fallthru
      _
    // Predicated region
    $region50: #{tpu_custom_call.1} parent=1 // pred_check
      _
    $region51: #{tpu_custom_call.1} parent=1 // pred_check_branch
      %84 = sbr.rel (0) target = $region53
    $region52: #{tpu_custom_call.1} parent=1 // pred_region
      %85 = dma.done [#allocation9], 832
    $region53: #{tpu_custom_call.1} parent=1 // pred_fallthru
      _
    %v87 = vld [vmem:[#allocation2] sm:$0xf]
    %v88 = vld [vmem:[#allocation5] sm:$0xff]
    %v89 = vld [vmem:[#allocation5 + $0x8] sm:$0xff]
    %v90 = vld [vmem:[#allocation5 + $0x10] sm:$0xff]
    %v91 = vld [vmem:[#allocation5 + $0x18] sm:$0xff]
    %v96 = vunpack.c.l.b16 %v88
    %v97 = vunpack.c.h.b16 %v88
    %v98 = vunpack.c.l.b16 %v89
    %v99 = vunpack.c.h.b16 %v89
    %v100 = vunpack.c.l.b16 %v90
    %v101 = vunpack.c.h.b16 %v90
    %v102 = vunpack.c.l.b16 %v91
    %v103 = vunpack.c.h.b16 %v91
    %v104 = vpack.c.b16 %v98, %v96
    %v105 = vpack.c.b16 %v99, %v97
    %v106 = vpack.c.b16 %v102, %v100
    %v107 = vpack.c.b16 %v103, %v101
    %vm112 = vcmask 261120
    %v114 = vsel %vm112, %v87, 0
    %116 = vmatprep.subr.bf16.mxu0 %v105
    %117 = vmatpush1.bf16.msra.mxu0 %v104
    %118 = vmatprep.subr.bf16.mxu0 %v107
    %119 = vmatpush1.bf16.msra.mxu0 %v106
    %120 = vmatprep.subr.bf16.mxu0 0
    %121 = vmatpush1.bf16.msra.mxu0 0
    %122 = vmatprep.subr.bf16.mxu0 0
    %123 = vmatpush1.bf16.msra.mxu0 0
    %124 = vmatprep.subr.bf16.mxu0 0
    %125 = vmatpush1.bf16.msra.mxu0 0
    %126 = vmatprep.subr.bf16.mxu0 0
    %127 = vmatpush1.bf16.msra.mxu0 0
    %128 = vmatprep.subr.bf16.mxu0 0
    %129 = vmatpush1.bf16.msra.mxu0 0
    %130 = vmatprep.subr.bf16.mxu0 0
    %131 = vmatpush1.bf16.msra.mxu0 0
    %132 = vmatprep.subr.bf16.mxu0 0
    %133 = vmatpush1.bf16.msra.mxu0 0
    %134 = vmatprep.subr.bf16.mxu0 0
    %135 = vmatpush1.bf16.msra.mxu0 0
    %136 = vmatprep.subr.bf16.mxu0 0
    %137 = vmatpush1.bf16.msra.mxu0 0
    %138 = vmatprep.subr.bf16.mxu0 0
    %139 = vmatpush1.bf16.msra.mxu0 0
    %140 = vmatprep.subr.bf16.mxu0 0
    %141 = vmatpush1.bf16.msra.mxu0 0
    %142 = vmatprep.subr.bf16.mxu0 0
    %143 = vmatpush1.bf16.msra.mxu0 0
    %144 = vmatprep.subr.bf16.mxu0 0
    %145 = vmatpush1.bf16.msra.mxu0 0
    %146 = vmatprep.subr.bf16.mxu0 0
    %147 = vmatpush1.bf16.msra.mxu0 0
    %148 = vmatprep.mubr.bf16.mxu0 0
    %149 = vmatmul.mubr.bf16.gmra.mrb[0].mxu0 %v114
    %v150 = vpop.f32.mrb[0].mxu0
    %v151 = vadd.f32 0.0, %v150
    %v152 = vpop.f32.mrb[0].mxu0
    %v153 = vadd.f32 0.0, %v152
    %v154 = vpop.f32.mrb[0].mxu0
    %v155 = vpop.f32.mrb[0].mxu0
    %156 = vdwg.mxu0
    %v157 = vld [vmem:[%s2] sm:$0x3]
    %v158 = vld [vmem:[%s3] sm:$0x3]
    %v159 = vrot.slane %v151, 4
    %v160 = vadd.f32 %v151, %v159
    %v161 = vrot.slane %v160, 2
    %v162 = vadd.f32 %v160, %v161
    %v163 = vrot.slane %v162, 1
    %v164 = vadd.f32 %v162, %v163
    %vm165 = vcmask 179200
    %v166 = vsel %vm165, %v153, 0.0
    %v167 = vrot.slane %v166, 4
    %v168 = vadd.f32 %v166, %v167
    %v169 = vrot.slane %v168, 2
    %v170 = vadd.f32 %v168, %v169
    %v171 = vrot.slane %v170, 1
    %v172 = vadd.f32 %v170, %v171
    %v173 = vrcp.pop 8.0
    %v174 = vmul.f32 %v164, %v173
    %v175 = vmul.f32 %v172, %v173
    %v176 = vsub.f32 %v151, %v174
    %v177 = vsub.f32 %v153, %v175
    %v178 = vmul.f32 %v176, %v176
    %v179 = vmul.f32 %v177, %v177
    %v180 = vrot.slane %v178, 4
    %v181 = vadd.f32 %v178, %v180
    %v182 = vrot.slane %v181, 2
    %v183 = vadd.f32 %v181, %v182
    %v184 = vrot.slane %v183, 1
    %v185 = vadd.f32 %v183, %v184
    %v186 = vsel %vm165, %v179, 0.0
    %v187 = vrot.slane %v186, 4
    %v188 = vadd.f32 %v186, %v187
    %v189 = vrot.slane %v188, 2
    %v190 = vadd.f32 %v188, %v189
    %v191 = vrot.slane %v190, 1
    %v192 = vadd.f32 %v190, %v191
    %v193 = vmul.f32 %v185, %v173
    %v194 = vmul.f32 %v192, %v173
    %v195 = vadd.f32 %v193, 1e-05
    %v196 = vadd.f32 %v194, 1e-05
    %v197 = vrsqrt.pop %v195
    %v198 = vrsqrt.pop %v196
    %v201 = vcombine.low %v197, %v198
    %v203 = vunpack.c.l.s4 1966171168
    %v204 = vunpack.c.0.s8 %v203
    %v205 = vlaneseq
    %v206 = vshrl.u32 %v205, 7
    %v207 = vsub.s32 %v204, %v206
    %v208 = vrot.slane %v201, %v207
    %v210 = vunpack.c.l.s4 1966171168
    %v211 = vunpack.c.0.s8 %v210
    %v212 = vlaneseq
    %v213 = vshrl.u32 %v212, 7
    %v214 = vsub.s32 %v211, %v213
    %v215 = vrot.slane %v208, %v214
    %v217 = vmul.f32 %v157, %v215
    %v219 = vlaneseq
    %v220 = vshrl.u32 %v219, 7
    %v221 = vsub.s32 0, %v220
    %v222 = vrot.slane %v217, %v221
    %v223 = vlaneseq
    %v224 = vshrl.u32 %v223, 7
    %v225 = vsub.s32 1, %v224
    %v226 = vrot.slane %v217, %v225
    %v229 = vmul.f32 %v174, %v222
    %v230 = vmul.f32 %v175, %v226
    %v233 = vcombine.low %v229, %v230
    %v235 = vunpack.c.l.s4 1966171168
    %v236 = vunpack.c.0.s8 %v235
    %v237 = vlaneseq
    %v238 = vshrl.u32 %v237, 7
    %v239 = vsub.s32 %v236, %v238
    %v240 = vrot.slane %v233, %v239
    %v242 = vunpack.c.l.s4 1966171168
    %v243 = vunpack.c.0.s8 %v242
    %v244 = vlaneseq
    %v245 = vshrl.u32 %v244, 7
    %v246 = vsub.s32 %v243, %v245
    %v247 = vrot.slane %v240, %v246
    %v249 = vsub.f32 %v158, %v247
    %v250 = vmul.f32 %v151, %v222
    %v251 = vmul.f32 %v153, %v226
    %v253 = vlaneseq
    %v254 = vshrl.u32 %v253, 7
    %v255 = vsub.s32 0, %v254
    %v256 = vrot.slane %v249, %v255
    %v257 = vlaneseq
    %v258 = vshrl.u32 %v257, 7
    %v259 = vsub.s32 1, %v258
    %v260 = vrot.slane %v249, %v259
    %v263 = vadd.f32 %v250, %v256
    %v264 = vadd.f32 %v251, %v260
    %v265 = vmul.f32 %v263, 0.2
    %v266 = vmul.f32 %v264, 0.2
    %v267 = vmax.f32 %v263, %v265
    %v268 = vmax.f32 %v264, %v266
    %v269 = vpack.c.bf16 %v267, %v267
    %v270 = vpack.c.bf16 %v268, %v268
    %v271 = vld [vmem:[#allocation7] sm:$0xf]
    %v272 = vld [vmem:[#allocation7 + $0x4] sm:$0xf]
    %v273 = vld [vmem:[#allocation7 + $0x8] sm:$0xf]
    %v274 = vld [vmem:[#allocation7 + $0xc] sm:$0xf]
    %v275 = vld [vmem:[#allocation7 + $0x10] sm:$0xf]
    %v276 = vld [vmem:[#allocation7 + $0x14] sm:$0xf]
    %v277 = vld [vmem:[#allocation7 + $0x18] sm:$0xf]
    %v278 = vld [vmem:[#allocation7 + $0x1c] sm:$0xf]
    %v279 = vld [vmem:[#allocation7 + $0x20] sm:$0xf]
    %v280 = vld [vmem:[#allocation7 + $0x24] sm:$0xf]
    %v281 = vld [vmem:[#allocation7 + $0x28] sm:$0xf]
    %v282 = vld [vmem:[#allocation7 + $0x2c] sm:$0xf]
    %v283 = vld [vmem:[#allocation7 + $0x30] sm:$0xf]
    %v284 = vld [vmem:[#allocation7 + $0x34] sm:$0xf]
    %v285 = vld [vmem:[#allocation7 + $0x38] sm:$0xf]
    %v286 = vld [vmem:[#allocation7 + $0x3c] sm:$0xf]
    %v287 = vld [vmem:[#allocation7 + $0x40] sm:$0xf]
    %v288 = vld [vmem:[#allocation7 + $0x44] sm:$0xf]
    %v289 = vld [vmem:[#allocation7 + $0x48] sm:$0x7]
    %v309 = vunpack.c.l.b16 %v271
    %v310 = vunpack.c.l.b16 %v272
    %v311 = vunpack.c.l.b16 %v273
    %v312 = vunpack.c.l.b16 %v274
    %v313 = vunpack.c.l.b16 %v275
    %v314 = vunpack.c.l.b16 %v276
    %v315 = vunpack.c.l.b16 %v277
    %v316 = vunpack.c.l.b16 %v278
    %v317 = vunpack.c.l.b16 %v279
    %v318 = vunpack.c.l.b16 %v280
    %v319 = vunpack.c.l.b16 %v281
    %v320 = vunpack.c.l.b16 %v282
    %v321 = vunpack.c.l.b16 %v283
    %v322 = vunpack.c.l.b16 %v284
    %v323 = vunpack.c.l.b16 %v285
    %v324 = vunpack.c.l.b16 %v286
    %v325 = vunpack.c.l.b16 %v287
    %v326 = vunpack.c.l.b16 %v288
    %v327 = vunpack.c.l.b16 %v289
    %v328 = vpack.c.b16 %v310, %v309
    %v329 = vpack.c.b16 %v312, %v311
    %v330 = vpack.c.b16 %v314, %v313
    %v331 = vpack.c.b16 %v316, %v315
    %v332 = vpack.c.b16 %v318, %v317
    %v333 = vpack.c.b16 %v320, %v319
    %v334 = vpack.c.b16 %v322, %v321
    %v335 = vpack.c.b16 %v324, %v323
    %v336 = vpack.c.b16 %v326, %v325
    %v337 = vpack.c.b16 %v327, %v327
    %v348 = vsel %vm165, %v270, 0
    %vm350 = vcmask 1042432
    %v352 = vsel %vm350, %v337, 0
    %354 = vmatprep.subr.bf16.mxu0 0
    %355 = vmatpush1.bf16.msra.mxu0 %v328
    %356 = vmatprep.subr.bf16.mxu0 0
    %357 = vmatpush1.bf16.msra.mxu0 %v329
    %358 = vmatprep.subr.bf16.mxu0 0
    %359 = vmatpush1.bf16.msra.mxu0 %v330
    %360 = vmatprep.subr.bf16.mxu0 0
    %361 = vmatpush1.bf16.msra.mxu0 %v331
    %362 = vmatprep.subr.bf16.mxu0 0
    %363 = vmatpush1.bf16.msra.mxu0 %v332
    %364 = vmatprep.subr.bf16.mxu0 0
    %365 = vmatpush1.bf16.msra.mxu0 %v333
    %366 = vmatprep.subr.bf16.mxu0 0
    %367 = vmatpush1.bf16.msra.mxu0 %v334
    %368 = vmatprep.subr.bf16.mxu0 0
    %369 = vmatpush1.bf16.msra.mxu0 %v335
    %370 = vmatprep.subr.bf16.mxu0 0
    %371 = vmatpush1.bf16.msra.mxu0 %v336
    %372 = vmatprep.subr.bf16.mxu0 0
    %373 = vmatpush1.bf16.msra.mxu0 %v352
    %374 = vmatprep.subr.bf16.mxu0 0
    %375 = vmatpush1.bf16.msra.mxu0 0
    %376 = vmatprep.subr.bf16.mxu0 0
    %377 = vmatpush1.bf16.msra.mxu0 0
    %378 = vmatprep.subr.bf16.mxu0 0
    %379 = vmatpush1.bf16.msra.mxu0 0
    %380 = vmatprep.subr.bf16.mxu0 0
    %381 = vmatpush1.bf16.msra.mxu0 0
    %382 = vmatprep.subr.bf16.mxu0 0
    %383 = vmatpush1.bf16.msra.mxu0 0
    %384 = vmatprep.subr.bf16.mxu0 0
    %385 = vmatpush1.bf16.msra.mxu0 0
    %386 = vmatprep.mubr.bf16.mxu0 %v348
    %387 = vmatmul.mubr.bf16.gmra.mrb[0].mxu0 %v269
    %v388 = vpop.f32.mrb[0].mxu0
    %v389 = vadd.f32 0.0, %v388
    %v390 = vpop.f32.mrb[0].mxu0
    %v391 = vpop.f32.mrb[0].mxu0
    %v392 = vpop.f32.mrb[0].mxu0
    %393 = vdwg.mxu0
    %v394 = vld [vmem:[%s5] sm:$0x1]
    %v395 = vld [vmem:[%s6] sm:$0x1]
    %vm396 = vcmask 818176
    %v397 = vsel %vm396, %v389, 0.0
    %v398 = vrot.slane %v397, 4
    %v399 = vadd.f32 %v397, %v398
    %v400 = vrot.slane %v399, 2
    %v401 = vadd.f32 %v399, %v400
    %v402 = vrot.slane %v401, 1
    %v403 = vadd.f32 %v401, %v402
    %v404 = vmul.f32 %v403, %v173
    %v405 = vsub.f32 %v389, %v404
    %v406 = vmul.f32 %v405, %v405
    %v407 = vsel %vm396, %v406, 0.0
    %v408 = vrot.slane %v407, 4
    %v409 = vadd.f32 %v407, %v408
    %v410 = vrot.slane %v409, 2
    %v411 = vadd.f32 %v409, %v410
    %v412 = vrot.slane %v411, 1
    %v413 = vadd.f32 %v411, %v412
    %v414 = vmul.f32 %v413, %v173
    %v415 = vadd.f32 %v414, 1e-05
    %v416 = vrsqrt.pop %v415
    %v417 = vmul.f32 %v394, %v416
    %v418 = vmul.f32 %v404, %v417
    %v419 = vsub.f32 %v395, %v418
    %v421 = vlaneseq
    %v422 = vshrl.u32 %v421, 7
    %v423 = vsub.s32 0, %v422
    %v424 = vrot.slane %v417, %v423
    %v426 = vmul.f32 %v389, %v424
    %v428 = vlaneseq
    %v429 = vshrl.u32 %v428, 7
    %v430 = vsub.s32 0, %v429
    %v431 = vrot.slane %v419, %v430
    %v433 = vadd.f32 %v426, %v431
    %v434 = vmul.f32 %v433, 0.2
    %v435 = vmax.f32 %v433, %v434
    %v436 = vpack.c.bf16 %v435, %v435
    %v437 = vld [vmem:[#allocation8] sm:$0xf]
    %v438 = vld [vmem:[#allocation8 + $0x4] sm:$0xf]
    %v439 = vld [vmem:[#allocation8 + $0x8] sm:$0xf]
    %v440 = vld [vmem:[#allocation8 + $0xc] sm:$0xf]
    %v441 = vld [vmem:[#allocation8 + $0x10] sm:$0xf]
    %v442 = vld [vmem:[#allocation8 + $0x14] sm:$0xf]
    %v443 = vld [vmem:[#allocation8 + $0x18] sm:$0xf]
    %v444 = vld [vmem:[#allocation8 + $0x1c] sm:$0xf]
    %v445 = vld [vmem:[#allocation8 + $0x20] sm:$0xf]
    %v446 = vld [vmem:[#allocation8 + $0x24] sm:$0xf]
    %v447 = vld [vmem:[#allocation8 + $0x28] sm:$0xf]
    %v448 = vld [vmem:[#allocation8 + $0x2c] sm:$0xf]
    %v449 = vld [vmem:[#allocation8 + $0x30] sm:$0x3]
    %v450 = vld [vmem:[%s8] sm:$0x1]
    %v452 = vlaneseq
    %v453 = vshrl.u32 %v452, 7
    %v454 = vsub.s32 0, %v453
    %v455 = vrot.slane %v450, %v454
    %v470 = vunpack.c.l.b16 %v437
    %v471 = vunpack.c.l.b16 %v438
    %v472 = vunpack.c.l.b16 %v439
    %v473 = vunpack.c.l.b16 %v440
    %v474 = vunpack.c.l.b16 %v441
    %v475 = vunpack.c.l.b16 %v442
    %v476 = vunpack.c.l.b16 %v443
    %v477 = vunpack.c.l.b16 %v444
    %v478 = vunpack.c.l.b16 %v445
    %v479 = vunpack.c.l.b16 %v446
    %v480 = vunpack.c.l.b16 %v447
    %v481 = vunpack.c.l.b16 %v448
    %v482 = vunpack.c.l.b16 %v449
    %v483 = vpack.c.b16 %v471, %v470
    %v484 = vpack.c.b16 %v473, %v472
    %v485 = vpack.c.b16 %v475, %v474
    %v486 = vpack.c.b16 %v477, %v476
    %v487 = vpack.c.b16 %v479, %v478
    %v488 = vpack.c.b16 %v481, %v480
    %v489 = vpack.c.b16 %v482, %v482
    %v497 = vsel %vm396, %v436, 0
    %vm499 = vcmask 1041408
    %v501 = vsel %vm499, %v489, 0
    %503 = vmatprep.subr.bf16.mxu0 0
    %504 = vmatpush1.bf16.msra.mxu0 %v483
    %505 = vmatprep.subr.bf16.mxu0 0
    %506 = vmatpush1.bf16.msra.mxu0 %v484
    %507 = vmatprep.subr.bf16.mxu0 0
    %508 = vmatpush1.bf16.msra.mxu0 %v485
    %509 = vmatprep.subr.bf16.mxu0 0
    %510 = vmatpush1.bf16.msra.mxu0 %v486
    %511 = vmatprep.subr.bf16.mxu0 0
    %512 = vmatpush1.bf16.msra.mxu0 %v487
    %513 = vmatprep.subr.bf16.mxu0 0
    %514 = vmatpush1.bf16.msra.mxu0 %v488
    %515 = vmatprep.subr.bf16.mxu0 0
    %516 = vmatpush1.bf16.msra.mxu0 %v501
    %517 = vmatprep.subr.bf16.mxu0 0
    %518 = vmatpush1.bf16.msra.mxu0 0
    %519 = vmatprep.subr.bf16.mxu0 0
    %520 = vmatpush1.bf16.msra.mxu0 0
    %521 = vmatprep.subr.bf16.mxu0 0
    %522 = vmatpush1.bf16.msra.mxu0 0
    %523 = vmatprep.subr.bf16.mxu0 0
    %524 = vmatpush1.bf16.msra.mxu0 0
    %525 = vmatprep.subr.bf16.mxu0 0
    %526 = vmatpush1.bf16.msra.mxu0 0
    %527 = vmatprep.subr.bf16.mxu0 0
    %528 = vmatpush1.bf16.msra.mxu0 0
    %529 = vmatprep.subr.bf16.mxu0 0
    %530 = vmatpush1.bf16.msra.mxu0 0
    %531 = vmatprep.subr.bf16.mxu0 0
    %532 = vmatpush1.bf16.msra.mxu0 0
    %533 = vmatprep.subr.bf16.mxu0 0
    %534 = vmatpush1.bf16.msra.mxu0 0
    %535 = vmatprep.mubr.bf16.mxu0 0
    %536 = vmatmul.mubr.bf16.gmra.mrb[0].mxu0 %v497
    %v537 = vpop.f32.mrb[0].mxu0
    %v538 = vadd.f32 %v455, %v537
    %v539 = vpop.f32.mrb[0].mxu0
    %v540 = vpop.f32.mrb[0].mxu0
    %v541 = vpop.f32.mrb[0].mxu0
    %542 = vdwg.mxu0
    %v543 = vxor.u32 %v538, 2147483648
    %v544 = vmul.f32 %v543, 1.442695
    %v545 = vpow.pop %v544
    %v546 = vadd.f32 %v545, 1.0
    %v547 = vrcp.pop %v546
    %v548 = vmul.f32 1.0, %v547
    %549 = vst [vmem:[#allocation10] sm:$0xff] %v548
    // Predicated region
    $region54: #{tpu_custom_call.1} parent=1 // pred_check
      _
    $region55: #{tpu_custom_call.1} parent=1 // pred_check_branch
      %551 = sbr.rel (0) target = $region57
    $region56: #{tpu_custom_call.1} parent=1 // pred_region
      %s553 = ssub.s32 128, 128
      %554 = vsyncadd [#allocation4], %s553
      %s556 = sshll.u32 [#allocation10], 4
      %s557 = int_to_ptr.vmem [resolvable:$true] %s556
      %559 = dma.vmem_to_hbm [thread:$0]  %s557, 128, %s9, [#allocation4]
    $region57: #{tpu_custom_call.1} parent=1 // pred_fallthru
      _
    // Predicated region
    $region58: #{tpu_custom_call.1} parent=1 // pred_check
      _
    $region59: #{tpu_custom_call.1} parent=1 // pred_check_branch
      %561 = sbr.rel (0) target = $region61
    $region60: #{tpu_custom_call.1} parent=1 // pred_region
      %562 = dma.done [#allocation4], 128
    $region61: #{tpu_custom_call.1} parent=1 // pred_fallthru
      _
    %563 = vsyncpa [#allocation3], 1
    %564 = vsyncpa [#allocation6], 1
    %565 = vsyncpa [#allocation9], 1
    %566 = vsyncpa [#allocation4], 1

</llo_original>
